<compile_context>
chip_gen: v5e
topology: v5e:2x2
jax: 0.10.0
libtpu: 0.0.40
codegen_flags: <defaults>
</compile_context>

<pallas_src>
import functools

import jax
import jax.numpy as jnp
from jax.experimental import pallas as pl
from jax.experimental.pallas import tpu as pltpu


def _se_kernel(x_ref, w1_ref, w2_ref, o_ref, *, inv_hw):
    # x_ref: (bb, C, HWp)  w1_ref: (C//r, C)  w2_ref: (C, C//r)  o_ref: (bb, C, HWp)
    x = x_ref[...].astype(jnp.float32)                     # (bb, C, HWp)

    # Global average pool over spatial (zero-padded lanes contribute 0 to the sum).
    y = jnp.sum(x, axis=-1) * inv_hw                       # (bb, C)

    # fc1 (no bias) + ReLU, on the VPU: contract over C (lane axis of w1).
    w1 = w1_ref[...].astype(jnp.float32)                   # (Ch, C)
    z = jnp.maximum(jnp.sum(y[:, None, :] * w1[None, :, :], axis=-1), 0.0)  # (bb, Ch)

    # fc2 (no bias), on the VPU: contract over Ch (lane axis of w2).
    w2 = w2_ref[...].astype(jnp.float32)                   # (C, Ch)
    s = jnp.sum(z[:, None, :] * w2[None, :, :], axis=-1)   # (bb, C)

    # Module's HardSigmoid(s) = s * HardSwish(s) = s^2 * relu6(s + 3) / 6.
    hswish = s * jnp.clip(s + 3.0, 0.0, 6.0) * (1.0 / 6.0)
    hsig = s * hswish                                      # (bb, C)

    # Scale the input by the per-channel gate (broadcast over the lane axis).
    o_ref[...] = (x * hsig[:, :, None]).astype(o_ref.dtype)


def se_layer(x, w1, w2, *, single_step_budget_bytes=6 * 1024 * 1024):
    """x: (B, C, H, W); w1: (C//r, C); w2: (C, C//r). Returns (B, C, H, W)."""
    B, C, H, W = x.shape
    HW = H * W
    LANE = 128

    # Lane-dense layout: pad H*W up to a multiple of 128 if needed.
    HWp = ((HW + LANE - 1) // LANE) * LANE
    x_flat = x.reshape(B, C, HW)
    if HWp != HW:
        x_flat = jnp.pad(x_flat, ((0, 0), (0, 0), (0, HWp - HW)))

    itemsize = jnp.dtype(x.dtype).itemsize
    slab_bytes = B * C * HWp * itemsize
    if slab_bytes <= single_step_budget_bytes:
        bb = B          # whole batch in one grid step: no pipeline bubble / step overhead
    else:
        bb = 1          # tile over batch; "parallel" axis feeds both v7x TensorCores
    # TODO(synk): for very large single-image feature maps (C*HW slab near VMEM),
    # add a second "arbitrary" grid axis over HW with a scratch sum + second pass.
    num_blocks = B // bb

    kernel = functools.partial(_se_kernel, inv_hw=1.0 / float(HW))

    Ch = w1.shape[0]
    cost = pl.CostEstimate(
        flops=2 * B * C * HW + 4 * B * C * Ch,                 # mean + scale + tiny FCs
        transcendentals=0,
        bytes_accessed=2 * B * C * HW * itemsize + (w1.size + w2.size) * itemsize,
    )

    out_flat = pl.pallas_call(
        kernel,
        out_shape=jax.ShapeDtypeStruct((B, C, HWp), x.dtype),
        grid=(num_blocks,),
        in_specs=[
            pl.BlockSpec((bb, C, HWp), lambda b: (b, 0, 0)),
            pl.BlockSpec(w1.shape, lambda b: (0, 0)),   # full tiny weight, constant block
            pl.BlockSpec(w2.shape, lambda b: (0, 0)),
        ],
        out_specs=pl.BlockSpec((bb, C, HWp), lambda b: (b, 0, 0)),
        compiler_params=pltpu.CompilerParams(
            dimension_semantics=("parallel",),
            vmem_limit_bytes=64 * 1024 * 1024,
        ),
        cost_estimate=cost,
    )(x_flat, w1, w2)

    if HWp != HW:
        out_flat = out_flat[:, :, :HW]
    return out_flat.reshape(B, C, H, W)


def se_layer_ref(x, w1, w2):
    """Pure-JAX reference mirroring the PyTorch forward."""
    y = jnp.mean(x, axis=(2, 3))                  # (B, C)
    z = jnp.maximum(y @ w1.T, 0.0)                # (B, C//r)
    s = z @ w2.T                                  # (B, C)
    hswish = s * jnp.clip(s + 3.0, 0.0, 6.0) / 6.0
    hsig = s * hswish                             # module's HardSigmoid = s * HardSwish(s)
    return x * hsig[:, :, None, None]


if __name__ == "__main__":
    # SELayer(channel=32, reduction=16) -> hidden = 2; H = W = 16 so H*W = 256 (lane-dense).
    B, C, H, W = 2, 32, 16, 16
    reduction = 16
    hidden = C // reduction

    key = jax.random.PRNGKey(0)
    kx, k1, k2 = jax.random.split(key, 3)
    x = jax.random.normal(kx, (B, C, H, W), dtype=jnp.float32)
    # Deterministic synthetic weights for the two bias-free Linear layers.
    w1 = jax.random.normal(k1, (hidden, C), dtype=jnp.float32) * (1.0 / jnp.sqrt(C))
    w2 = jax.random.normal(k2, (C, hidden), dtype=jnp.float32) * (1.0 / jnp.sqrt(hidden))

    out = se_layer(x, w1, w2)
    out = jax.block_until_ready(out)

    ref = se_layer_ref(x, w1, w2)
    assert out.shape == (B, C, H, W)
    assert jnp.allclose(out, ref, atol=1e-5, rtol=1e-5), "mismatch vs reference"

    print("KERNEL_OK")
</pallas_src>

<mosaic_0001>
module attributes {stable_mosaic.version = 11 : i64} {
  func.func @_se_kernel(%arg0: i32, %arg1: memref<2x32x256xf32, #tpu.memory_space<vmem>>, %arg2: memref<2x32xf32, #tpu.memory_space<vmem>>, %arg3: memref<32x2xf32, #tpu.memory_space<vmem>>, %arg4: memref<2x32x256xf32, #tpu.memory_space<vmem>>) attributes {dimension_semantics = [#tpu.dimension_semantics<parallel>], iteration_bounds = array<i64: 1>, scalar_prefetch = 0 : i64, scratch_operands = 0 : i64, tpu.core_type = #tpu.core_type<tc>, window_params = [{transform_indices = @transform_0, window_bounds = array<i64: 2, 32, 256>}, {pipeline_mode = #tpu.pipeline_mode<synchronous>, transform_indices = @transform_1, window_bounds = array<i64: 2, 32>}, {pipeline_mode = #tpu.pipeline_mode<synchronous>, transform_indices = @transform_2, window_bounds = array<i64: 32, 2>}, {transform_indices = @transform_3, window_bounds = array<i64: 2, 32, 256>}]} {
    %c0 = arith.constant 0 : index
    %c0_0 = arith.constant 0 : index
    %c0_1 = arith.constant 0 : index
    %0 = vector.load %arg1[%c0, %c0_0, %c0_1] : memref<2x32x256xf32, #tpu.memory_space<vmem>>, vector<2x32x256xf32>
    %cst = arith.constant dense<0.000000e+00> : vector<2x32xf32>
    %1 = vector.multi_reduction <add>, %0, %cst [2] : vector<2x32x256xf32> to vector<2x32xf32>
    %cst_2 = arith.constant 3.906250e-03 : f32
    %2 = vector.broadcast %cst_2 : f32 to vector<2x32xf32>
    %3 = arith.mulf %1, %2 : vector<2x32xf32>
    %c0_3 = arith.constant 0 : index
    %c0_4 = arith.constant 0 : index
    %4 = vector.load %arg2[%c0_3, %c0_4] : memref<2x32xf32, #tpu.memory_space<vmem>>, vector<2x32xf32>
    %5 = vector.shape_cast %3 : vector<2x32xf32> to vector<2x1x32xf32>
    %6 = vector.shape_cast %4 : vector<2x32xf32> to vector<1x2x32xf32>
    %7 = vector.broadcast %5 : vector<2x1x32xf32> to vector<2x2x32xf32>
    %8 = vector.broadcast %6 : vector<1x2x32xf32> to vector<2x2x32xf32>
    %9 = arith.mulf %7, %8 : vector<2x2x32xf32>
    %cst_5 = arith.constant dense<0.000000e+00> : vector<2x2xf32>
    %10 = vector.multi_reduction <add>, %9, %cst_5 [2] : vector<2x2x32xf32> to vector<2x2xf32>
    %cst_6 = arith.constant 0.000000e+00 : f32
    %11 = vector.broadcast %cst_6 : f32 to vector<2x2xf32>
    %12 = arith.maximumf %10, %11 : vector<2x2xf32>
    %c0_7 = arith.constant 0 : index
    %c0_8 = arith.constant 0 : index
    %13 = vector.load %arg3[%c0_7, %c0_8] : memref<32x2xf32, #tpu.memory_space<vmem>>, vector<32x2xf32>
    %14 = vector.shape_cast %12 : vector<2x2xf32> to vector<2x1x2xf32>
    %15 = vector.shape_cast %13 : vector<32x2xf32> to vector<1x32x2xf32>
    %16 = vector.broadcast %14 : vector<2x1x2xf32> to vector<2x32x2xf32>
    %17 = vector.broadcast %15 : vector<1x32x2xf32> to vector<2x32x2xf32>
    %18 = arith.mulf %16, %17 : vector<2x32x2xf32>
    %cst_9 = arith.constant dense<0.000000e+00> : vector<2x32xf32>
    %19 = vector.multi_reduction <add>, %18, %cst_9 [2] : vector<2x32x2xf32> to vector<2x32xf32>
    %cst_10 = arith.constant 3.000000e+00 : f32
    %20 = vector.broadcast %cst_10 : f32 to vector<2x32xf32>
    %21 = arith.addf %19, %20 : vector<2x32xf32>
    %cst_11 = arith.constant 0.000000e+00 : f32
    %cst_12 = arith.constant 6.000000e+00 : f32
    %22 = vector.broadcast %cst_11 : f32 to vector<2x32xf32>
    %23 = arith.maximumf %22, %21 : vector<2x32xf32>
    %24 = vector.broadcast %cst_12 : f32 to vector<2x32xf32>
    %25 = arith.minimumf %24, %23 : vector<2x32xf32>
    %26 = arith.mulf %19, %25 : vector<2x32xf32>
    %cst_13 = arith.constant 0.166666672 : f32
    %27 = vector.broadcast %cst_13 : f32 to vector<2x32xf32>
    %28 = arith.mulf %26, %27 : vector<2x32xf32>
    %29 = arith.mulf %19, %28 : vector<2x32xf32>
    %30 = vector.shape_cast %29 : vector<2x32xf32> to vector<2x32x1xf32>
    %31 = vector.broadcast %30 : vector<2x32x1xf32> to vector<2x32x256xf32>
    %32 = arith.mulf %0, %31 : vector<2x32x256xf32>
    %c0_14 = arith.constant 0 : index
    %c0_15 = arith.constant 0 : index
    %c0_16 = arith.constant 0 : index
    %33 = vector.load %arg4[%c0_14, %c0_15, %c0_16] : memref<2x32x256xf32, #tpu.memory_space<vmem>>, vector<2x32x256xf32>
    tpu.vector_store %arg4[%c0_14, %c0_15, %c0_16], %32 {strides = array<i32>} : memref<2x32x256xf32, #tpu.memory_space<vmem>>, vector<2x32x256xf32>,
    return
  }
  func.func @transform_0(%arg0: i32) -> (i32, i32, i32) {
    %c0_i32 = arith.constant 0 : i32
    %c0_i32_0 = arith.constant 0 : i32
    %c0_i32_1 = arith.constant 0 : i32
    return %arg0, %c0_i32, %c0_i32_0 : i32, i32, i32
  }
  func.func @transform_1(%arg0: i32) -> (i32, i32) {
    %c0_i32 = arith.constant 0 : i32
    %c0_i32_0 = arith.constant 0 : i32
    %c0_i32_1 = arith.constant 0 : i32
    return %c0_i32, %c0_i32_0 : i32, i32
  }
  func.func @transform_2(%arg0: i32) -> (i32, i32) {
    %c0_i32 = arith.constant 0 : i32
    %c0_i32_0 = arith.constant 0 : i32
    %c0_i32_1 = arith.constant 0 : i32
    return %c0_i32, %c0_i32_0 : i32, i32
  }
  func.func @transform_3(%arg0: i32) -> (i32, i32, i32) {
    %c0_i32 = arith.constant 0 : i32
    %c0_i32_0 = arith.constant 0 : i32
    %c0_i32_1 = arith.constant 0 : i32
    return %arg0, %c0_i32, %c0_i32_0 : i32, i32, i32
  }
}

</mosaic_0001>

<llo_original>
// kernel: tpu_custom_call.1
$region0: #{tpu_custom_call.1}
  #allocation0 [shape = 'u32[]', space=smem, size = 0x4, offset = 0x4, fixed_abs, tag = 'smem constant byte address 0x4 - core index']
  #allocation1 [shape = 'u32[72,128]{1,0:T(1,128)}', space=vmem, size = 0x9000, scoped, tag = 'internal scratch']
  %s0 = inlined_call_operand.hbm [shape: f32[2,32,256], index: 0, kind: input, shape index: {}]
  %s1 = inlined_call_operand.vmem [shape: f32[2,32], index: 1, kind: input, shape index: {}]
  %s2 = inlined_call_operand.vmem [shape: f32[32,2], index: 2, kind: input, shape index: {}]
  %s3 = inlined_call_operand.hbm [shape: f32[2,32,256], index: 3, kind: output, shape index: {}]
  %s4 = sld [smem:[#allocation0]]
  $region26: #{tpu_custom_call.1} parent=0
    _
  %s6 = ssub.s32 1, %s4
  %s7 = scalar_select 0, %s6, %s4
  $region1: #{tpu_custom_call.1} parent=0
    #allocation2 [shape = 'u8[65536]{0}', space=vmem, size = 0x10000, scoped, tag = 'input window, operand 0, single buffered']
    #allocation3 [shape = 's32[1]{0}', space=sflag, size = 0x4, scoped, tag = 'scoped memory for tpu_custom_call.1']
    #allocation4 [shape = 's32[1]{0}', space=sflag, size = 0x4, scoped, tag = 'scoped memory for tpu_custom_call.1']
    #allocation5 [shape = 'u8[65536]{0}', space=vmem, size = 0x10000, scoped, tag = 'output window, operand 0, single buffered']
    %8 = vsyncpa [#allocation3], 0
    %9 = vsyncpa [#allocation4], 0
    // Predicated region
    $region2: #{tpu_custom_call.1} parent=1 // pred_check
      _
    $region3: #{tpu_custom_call.1} parent=1 // pred_check_branch
      %11 = sbr.rel (0) target = $region5
    $region4: #{tpu_custom_call.1} parent=1 // pred_region
      %13 = vsyncadd [#allocation3], 0
      %s14 = sshll.u32 %s0, 4
      %s15 = int_to_ptr.hbm [resolvable:$true] %s14
      %s16 = sshll.u32 [#allocation2], 4
      %s17 = int_to_ptr.vmem [resolvable:$true] %s16
      %22 = dma.hbm_to_vmem [thread:$0]  %s15, 2048, %s17, [#allocation3], 256, 256, 16
    $region5: #{tpu_custom_call.1} parent=1 // pred_fallthru
      _
    // Predicated region
    $region6: #{tpu_custom_call.1} parent=1 // pred_check
      _
    $region7: #{tpu_custom_call.1} parent=1 // pred_check_branch
      %24 = sbr.rel (0) target = $region9
    $region8: #{tpu_custom_call.1} parent=1 // pred_region
      _
    $region9: #{tpu_custom_call.1} parent=1 // pred_fallthru
      _
    // Predicated region
    $region10: #{tpu_custom_call.1} parent=1 // pred_check
      _
    $region11: #{tpu_custom_call.1} parent=1 // pred_check_branch
      %26 = sbr.rel (0) target = $region13
    $region12: #{tpu_custom_call.1} parent=1 // pred_region
      _
    $region13: #{tpu_custom_call.1} parent=1 // pred_fallthru
      _
    // Predicated region
    $region14: #{tpu_custom_call.1} parent=1 // pred_check
      _
    $region15: #{tpu_custom_call.1} parent=1 // pred_check_branch
      %28 = sbr.rel (0) target = $region17
    $region16: #{tpu_custom_call.1} parent=1 // pred_region
      %30 = dma.done [#allocation3], 2048
    $region17: #{tpu_custom_call.1} parent=1 // pred_fallthru
      _
    %v31 = vld [vmem:[#allocation2] sm:$0xff]
    %v32 = vld [vmem:[#allocation2 + $0x8] sm:$0xff]
    %v33 = vld [vmem:[#allocation2 + $0x10] sm:$0xff]
    %v34 = vld [vmem:[#allocation2 + $0x18] sm:$0xff]
    %v35 = vld [vmem:[#allocation2 + $0x20] sm:$0xff]
    %v36 = vld [vmem:[#allocation2 + $0x28] sm:$0xff]
    %v37 = vld [vmem:[#allocation2 + $0x30] sm:$0xff]
    %v38 = vld [vmem:[#allocation2 + $0x38] sm:$0xff]
    %v39 = vld [vmem:[#allocation2 + $0x40] sm:$0xff]
    %v40 = vld [vmem:[#allocation2 + $0x48] sm:$0xff]
    %v41 = vld [vmem:[#allocation2 + $0x50] sm:$0xff]
    %v42 = vld [vmem:[#allocation2 + $0x58] sm:$0xff]
    %v43 = vld [vmem:[#allocation2 + $0x60] sm:$0xff]
    %v44 = vld [vmem:[#allocation2 + $0x68] sm:$0xff]
    %v45 = vld [vmem:[#allocation2 + $0x70] sm:$0xff]
    %v46 = vld [vmem:[#allocation2 + $0x78] sm:$0xff]
    %v47 = vadd.f32 %v31, %v32
    %48 = vadd.xlane.f32.xlu0 %v47
    %v49 = vpop.xlane.xlu0 %48
    %v50 = vadd.f32 %v33, %v34
    %51 = vadd.xlane.f32.xlu0 %v50
    %v52 = vpop.xlane.xlu0 %51
    %v53 = vadd.f32 %v35, %v36
    %54 = vadd.xlane.f32.xlu0 %v53
    %v55 = vpop.xlane.xlu0 %54
    %v56 = vadd.f32 %v37, %v38
    %57 = vadd.xlane.f32.xlu0 %v56
    %v58 = vpop.xlane.xlu0 %57
    %v59 = vadd.f32 %v39, %v40
    %60 = vadd.xlane.f32.xlu0 %v59
    %v61 = vpop.xlane.xlu0 %60
    %v62 = vadd.f32 %v41, %v42
    %63 = vadd.xlane.f32.xlu0 %v62
    %v64 = vpop.xlane.xlu0 %63
    %v65 = vadd.f32 %v43, %v44
    %66 = vadd.xlane.f32.xlu0 %v65
    %v67 = vpop.xlane.xlu0 %66
    %v68 = vadd.f32 %v45, %v46
    %69 = vadd.xlane.f32.xlu0 %v68
    %v70 = vpop.xlane.xlu0 %69
    %v71 = vmul.f32 %v49, 0.00390625
    %v72 = vmul.f32 %v52, 0.00390625
    %v73 = vmul.f32 %v55, 0.00390625
    %v74 = vmul.f32 %v58, 0.00390625
    %v75 = vmul.f32 %v61, 0.00390625
    %v76 = vmul.f32 %v64, 0.00390625
    %v77 = vmul.f32 %v67, 0.00390625
    %v78 = vmul.f32 %v70, 0.00390625
    %v79 = vld [vmem:[%s1] sm:$0x3]
    %v81 = vperm.slane %v79, 0
    %v82 = vlaneseq
    %v83 = vshrl.u32 %v82, 7
    %85 = vset.pattern.permute.xlu0 %v83
    %86 = vperm.xlu0 %85, %v81
    %v87 = vpop.permute.xlu0 %86
    %v88 = vlaneseq
    %v89 = vshrl.u32 %v88, 7
    %v90 = vadd.s32 %v89, 8
    %91 = vset.pattern.permute.xlu0 %v90
    %92 = vperm.xlu0 %91, %v81
    %v93 = vpop.permute.xlu0 %92
    %v94 = vlaneseq
    %v95 = vshrl.u32 %v94, 7
    %v96 = vadd.s32 %v95, 16
    %97 = vset.pattern.permute.xlu0 %v96
    %98 = vperm.xlu0 %97, %v81
    %v99 = vpop.permute.xlu0 %98
    %v100 = vlaneseq
    %v101 = vshrl.u32 %v100, 7
    %v102 = vadd.s32 %v101, 24
    %103 = vset.pattern.permute.xlu0 %v102
    %104 = vperm.xlu0 %103, %v81
    %v105 = vpop.permute.xlu0 %104
    %v106 = vperm.slane %v79, 1
    %v107 = vlaneseq
    %v108 = vshrl.u32 %v107, 7
    %110 = vset.pattern.permute.xlu0 %v108
    %111 = vperm.xlu0 %110, %v106
    %v112 = vpop.permute.xlu0 %111
    %v113 = vlaneseq
    %v114 = vshrl.u32 %v113, 7
    %v115 = vadd.s32 %v114, 8
    %116 = vset.pattern.permute.xlu0 %v115
    %117 = vperm.xlu0 %116, %v106
    %v118 = vpop.permute.xlu0 %117
    %v119 = vlaneseq
    %v120 = vshrl.u32 %v119, 7
    %v121 = vadd.s32 %v120, 16
    %122 = vset.pattern.permute.xlu0 %v121
    %123 = vperm.xlu0 %122, %v106
    %v124 = vpop.permute.xlu0 %123
    %v125 = vlaneseq
    %v126 = vshrl.u32 %v125, 7
    %v127 = vadd.s32 %v126, 24
    %128 = vset.pattern.permute.xlu0 %v127
    %129 = vperm.xlu0 %128, %v106
    %v130 = vpop.permute.xlu0 %129
    %v139 = vmul.f32 %v71, %v87
    %v140 = vmul.f32 %v72, %v93
    %v141 = vmul.f32 %v73, %v99
    %v142 = vmul.f32 %v74, %v105
    %v143 = vmul.f32 %v71, %v112
    %v144 = vmul.f32 %v72, %v118
    %v145 = vmul.f32 %v73, %v124
    %v146 = vmul.f32 %v74, %v130
    %v147 = vmul.f32 %v75, %v87
    %v148 = vmul.f32 %v76, %v93
    %v149 = vmul.f32 %v77, %v99
    %v150 = vmul.f32 %v78, %v105
    %v151 = vmul.f32 %v75, %v112
    %v152 = vmul.f32 %v76, %v118
    %v153 = vmul.f32 %v77, %v124
    %v154 = vmul.f32 %v78, %v130
    %171 = vset.pattern.permute.xlu0 0
    %172 = vperm.xlu0 %171, %v139
    %v173 = vpop.permute.xlu0 %172
    %174 = vset.pattern.permute.xlu0 0
    %175 = vperm.xlu0 %174, %v140
    %v176 = vpop.permute.xlu0 %175
    %177 = vset.pattern.permute.xlu0 0
    %178 = vperm.xlu0 %177, %v141
    %v179 = vpop.permute.xlu0 %178
    %180 = vset.pattern.permute.xlu0 0
    %181 = vperm.xlu0 %180, %v142
    %v182 = vpop.permute.xlu0 %181
    %183 = vset.pattern.permute.xlu0 0
    %184 = vperm.xlu0 %183, %v143
    %v185 = vpop.permute.xlu0 %184
    %186 = vset.pattern.permute.xlu0 0
    %187 = vperm.xlu0 %186, %v144
    %v188 = vpop.permute.xlu0 %187
    %189 = vset.pattern.permute.xlu0 0
    %190 = vperm.xlu0 %189, %v145
    %v191 = vpop.permute.xlu0 %190
    %192 = vset.pattern.permute.xlu0 0
    %193 = vperm.xlu0 %192, %v146
    %v194 = vpop.permute.xlu0 %193
    %195 = vset.pattern.permute.xlu0 0
    %196 = vperm.xlu0 %195, %v147
    %v197 = vpop.permute.xlu0 %196
    %198 = vset.pattern.permute.xlu0 0
    %199 = vperm.xlu0 %198, %v148
    %v200 = vpop.permute.xlu0 %199
    %201 = vset.pattern.permute.xlu0 0
    %202 = vperm.xlu0 %201, %v149
    %v203 = vpop.permute.xlu0 %202
    %204 = vset.pattern.permute.xlu0 0
    %205 = vperm.xlu0 %204, %v150
    %v206 = vpop.permute.xlu0 %205
    %207 = vset.pattern.permute.xlu0 0
    %208 = vperm.xlu0 %207, %v151
    %v209 = vpop.permute.xlu0 %208
    %210 = vset.pattern.permute.xlu0 0
    %211 = vperm.xlu0 %210, %v152
    %v212 = vpop.permute.xlu0 %211
    %213 = vset.pattern.permute.xlu0 0
    %214 = vperm.xlu0 %213, %v153
    %v215 = vpop.permute.xlu0 %214
    %216 = vset.pattern.permute.xlu0 0
    %217 = vperm.xlu0 %216, %v154
    %v218 = vpop.permute.xlu0 %217
    %v219 = vlaneseq
    %v220 = vand.u32 %v219, 127
    %v221 = vperm.slane %v173, %v220
    %v222 = vadd.s32 %v220, 4294967288
    %v223 = vperm.slane %v176, %v222
    %vm224 = vcmask 130112
    %v225 = vsel %vm224, %v223, %v221
    %v226 = vadd.s32 %v220, 4294967280
    %v227 = vperm.slane %v179, %v226
    %vm228 = vcmask 195712
    %v229 = vsel %vm228, %v227, %v225
    %v230 = vadd.s32 %v220, 4294967272
    %v231 = vperm.slane %v182, %v230
    %vm232 = vcmask 261312
    %v233 = vsel %vm232, %v231, %v229
    %v234 = vperm.slane %v185, %v220
    %v235 = vperm.slane %v188, %v222
    %v236 = vsel %vm224, %v235, %v234
    %v237 = vperm.slane %v191, %v226
    %v238 = vsel %vm228, %v237, %v236
    %v239 = vperm.slane %v194, %v230
    %v240 = vsel %vm232, %v239, %v238
    %v241 = vperm.slane %v197, %v220
    %v242 = vperm.slane %v200, %v222
    %v243 = vsel %vm224, %v242, %v241
    %v244 = vperm.slane %v203, %v226
    %v245 = vsel %vm228, %v244, %v243
    %v246 = vperm.slane %v206, %v230
    %v247 = vsel %vm232, %v246, %v245
    %v248 = vperm.slane %v209, %v220
    %v249 = vperm.slane %v212, %v222
    %v250 = vsel %vm224, %v249, %v248
    %v251 = vperm.slane %v215, %v226
    %v252 = vsel %vm228, %v251, %v250
    %v253 = vperm.slane %v218, %v230
    %v254 = vsel %vm232, %v253, %v252
    %vm255 = vcmask 1041409
    %v256 = vsel %vm255, %v240, %v233
    %v257 = vsel %vm255, %v254, %v247
    %vm260 = vcmask 254976
    %v261 = vsel %vm260, %v256, 0.0
    %262 = vadd.xlane.f32.xlu0 %v261
    %v263 = vpop.xlane.xlu0 %262
    %v264 = vsel %vm260, %v257, 0.0
    %265 = vadd.xlane.f32.xlu0 %v264
    %v266 = vpop.xlane.xlu0 %265
    %v267 = vmax.f32 %v263, 0.0
    %v268 = vmax.f32 %v266, 0.0
    %v269 = vld [vmem:[%s2] sm:$0xff]
    %v270 = vld [vmem:[%s2 + $0x8] sm:$0xff]
    %v271 = vld [vmem:[%s2 + $0x10] sm:$0xff]
    %v272 = vld [vmem:[%s2 + $0x18] sm:$0xff]
    %v277 = vperm.slane %v269, 0
    %v278 = vlaneseq
    %v279 = vshrl.u32 %v278, 7
    %281 = vset.pattern.permute.xlu0 %v279
    %282 = vperm.xlu0 %281, %v277
    %v283 = vpop.permute.xlu0 %282
    %v284 = vperm.slane %v269, 1
    %v285 = vlaneseq
    %v286 = vshrl.u32 %v285, 7
    %288 = vset.pattern.permute.xlu0 %v286
    %289 = vperm.xlu0 %288, %v284
    %v290 = vpop.permute.xlu0 %289
    %v291 = vperm.slane %v269, 2
    %v292 = vlaneseq
    %v293 = vshrl.u32 %v292, 7
    %295 = vset.pattern.permute.xlu0 %v293
    %296 = vperm.xlu0 %295, %v291
    %v297 = vpop.permute.xlu0 %296
    %v298 = vperm.slane %v269, 3
    %v299 = vlaneseq
    %v300 = vshrl.u32 %v299, 7
    %302 = vset.pattern.permute.xlu0 %v300
    %303 = vperm.xlu0 %302, %v298
    %v304 = vpop.permute.xlu0 %303
    %v305 = vperm.slane %v269, 4
    %v306 = vlaneseq
    %v307 = vshrl.u32 %v306, 7
    %309 = vset.pattern.permute.xlu0 %v307
    %310 = vperm.xlu0 %309, %v305
    %v311 = vpop.permute.xlu0 %310
    %v312 = vperm.slane %v269, 5
    %v313 = vlaneseq
    %v314 = vshrl.u32 %v313, 7
    %316 = vset.pattern.permute.xlu0 %v314
    %317 = vperm.xlu0 %316, %v312
    %v318 = vpop.permute.xlu0 %317
    %v319 = vperm.slane %v269, 6
    %v320 = vlaneseq
    %v321 = vshrl.u32 %v320, 7
    %323 = vset.pattern.permute.xlu0 %v321
    %324 = vperm.xlu0 %323, %v319
    %v325 = vpop.permute.xlu0 %324
    %v326 = vperm.slane %v269, 7
    %v327 = vlaneseq
    %v328 = vshrl.u32 %v327, 7
    %330 = vset.pattern.permute.xlu0 %v328
    %331 = vperm.xlu0 %330, %v326
    %v332 = vpop.permute.xlu0 %331
    %v333 = vperm.slane %v270, 0
    %v334 = vlaneseq
    %v335 = vshrl.u32 %v334, 7
    %337 = vset.pattern.permute.xlu0 %v335
    %338 = vperm.xlu0 %337, %v333
    %v339 = vpop.permute.xlu0 %338
    %v340 = vperm.slane %v270, 1
    %v341 = vlaneseq
    %v342 = vshrl.u32 %v341, 7
    %344 = vset.pattern.permute.xlu0 %v342
    %345 = vperm.xlu0 %344, %v340
    %v346 = vpop.permute.xlu0 %345
    %v347 = vperm.slane %v270, 2
    %v348 = vlaneseq
    %v349 = vshrl.u32 %v348, 7
    %351 = vset.pattern.permute.xlu0 %v349
    %352 = vperm.xlu0 %351, %v347
    %v353 = vpop.permute.xlu0 %352
    %v354 = vperm.slane %v270, 3
    %v355 = vlaneseq
    %v356 = vshrl.u32 %v355, 7
    %358 = vset.pattern.permute.xlu0 %v356
    %359 = vperm.xlu0 %358, %v354
    %v360 = vpop.permute.xlu0 %359
    %v361 = vperm.slane %v270, 4
    %v362 = vlaneseq
    %v363 = vshrl.u32 %v362, 7
    %365 = vset.pattern.permute.xlu0 %v363
    %366 = vperm.xlu0 %365, %v361
    %v367 = vpop.permute.xlu0 %366
    %v368 = vperm.slane %v270, 5
    %v369 = vlaneseq
    %v370 = vshrl.u32 %v369, 7
    %372 = vset.pattern.permute.xlu0 %v370
    %373 = vperm.xlu0 %372, %v368
    %v374 = vpop.permute.xlu0 %373
    %v375 = vperm.slane %v270, 6
    %v376 = vlaneseq
    %v377 = vshrl.u32 %v376, 7
    %379 = vset.pattern.permute.xlu0 %v377
    %380 = vperm.xlu0 %379, %v375
    %v381 = vpop.permute.xlu0 %380
    %v382 = vperm.slane %v270, 7
    %v383 = vlaneseq
    %v384 = vshrl.u32 %v383, 7
    %386 = vset.pattern.permute.xlu0 %v384
    %387 = vperm.xlu0 %386, %v382
    %v388 = vpop.permute.xlu0 %387
    %v389 = vperm.slane %v271, 0
    %v390 = vlaneseq
    %v391 = vshrl.u32 %v390, 7
    %393 = vset.pattern.permute.xlu0 %v391
    %394 = vperm.xlu0 %393, %v389
    %v395 = vpop.permute.xlu0 %394
    %v396 = vperm.slane %v271, 1
    %v397 = vlaneseq
    %v398 = vshrl.u32 %v397, 7
    %400 = vset.pattern.permute.xlu0 %v398
    %401 = vperm.xlu0 %400, %v396
    %v402 = vpop.permute.xlu0 %401
    %v403 = vperm.slane %v271, 2
    %v404 = vlaneseq
    %v405 = vshrl.u32 %v404, 7
    %407 = vset.pattern.permute.xlu0 %v405
    %408 = vperm.xlu0 %407, %v403
    %v409 = vpop.permute.xlu0 %408
    %v410 = vperm.slane %v271, 3
    %v411 = vlaneseq
    %v412 = vshrl.u32 %v411, 7
    %414 = vset.pattern.permute.xlu0 %v412
    %415 = vperm.xlu0 %414, %v410
    %v416 = vpop.permute.xlu0 %415
    %v417 = vperm.slane %v271, 4
    %v418 = vlaneseq
    %v419 = vshrl.u32 %v418, 7
    %421 = vset.pattern.permute.xlu0 %v419
    %422 = vperm.xlu0 %421, %v417
    %v423 = vpop.permute.xlu0 %422
    %v424 = vperm.slane %v271, 5
    %v425 = vlaneseq
    %v426 = vshrl.u32 %v425, 7
    %428 = vset.pattern.permute.xlu0 %v426
    %429 = vperm.xlu0 %428, %v424
    %v430 = vpop.permute.xlu0 %429
    %v431 = vperm.slane %v271, 6
    %v432 = vlaneseq
    %v433 = vshrl.u32 %v432, 7
    %435 = vset.pattern.permute.xlu0 %v433
    %436 = vperm.xlu0 %435, %v431
    %v437 = vpop.permute.xlu0 %436
    %v438 = vperm.slane %v271, 7
    %v439 = vlaneseq
    %v440 = vshrl.u32 %v439, 7
    %442 = vset.pattern.permute.xlu0 %v440
    %443 = vperm.xlu0 %442, %v438
    %v444 = vpop.permute.xlu0 %443
    %v445 = vperm.slane %v272, 0
    %v446 = vlaneseq
    %v447 = vshrl.u32 %v446, 7
    %449 = vset.pattern.permute.xlu0 %v447
    %450 = vperm.xlu0 %449, %v445
    %v451 = vpop.permute.xlu0 %450
    %v452 = vperm.slane %v272, 1
    %v453 = vlaneseq
    %v454 = vshrl.u32 %v453, 7
    %456 = vset.pattern.permute.xlu0 %v454
    %457 = vperm.xlu0 %456, %v452
    %v458 = vpop.permute.xlu0 %457
    %v459 = vperm.slane %v272, 2
    %v460 = vlaneseq
    %v461 = vshrl.u32 %v460, 7
    %463 = vset.pattern.permute.xlu0 %v461
    %464 = vperm.xlu0 %463, %v459
    %v465 = vpop.permute.xlu0 %464
    %v466 = vperm.slane %v272, 3
    %v467 = vlaneseq
    %v468 = vshrl.u32 %v467, 7
    %470 = vset.pattern.permute.xlu0 %v468
    %471 = vperm.xlu0 %470, %v466
    %v472 = vpop.permute.xlu0 %471
    %v473 = vperm.slane %v272, 4
    %v474 = vlaneseq
    %v475 = vshrl.u32 %v474, 7
    %477 = vset.pattern.permute.xlu0 %v475
    %478 = vperm.xlu0 %477, %v473
    %v479 = vpop.permute.xlu0 %478
    %v480 = vperm.slane %v272, 5
    %v481 = vlaneseq
    %v482 = vshrl.u32 %v481, 7
    %484 = vset.pattern.permute.xlu0 %v482
    %485 = vperm.xlu0 %484, %v480
    %v486 = vpop.permute.xlu0 %485
    %v487 = vperm.slane %v272, 6
    %v488 = vlaneseq
    %v489 = vshrl.u32 %v488, 7
    %491 = vset.pattern.permute.xlu0 %v489
    %492 = vperm.xlu0 %491, %v487
    %v493 = vpop.permute.xlu0 %492
    %v494 = vperm.slane %v272, 7
    %v495 = vlaneseq
    %v496 = vshrl.u32 %v495, 7
    %498 = vset.pattern.permute.xlu0 %v496
    %499 = vperm.xlu0 %498, %v494
    %v500 = vpop.permute.xlu0 %499
    %v533 = vmul.f32 %v267, %v283
    %v534 = vmul.f32 %v267, %v290
    %v535 = vmul.f32 %v267, %v297
    %v536 = vmul.f32 %v267, %v304
    %v537 = vmul.f32 %v267, %v311
    %v538 = vmul.f32 %v267, %v318
    %v539 = vmul.f32 %v267, %v325
    %v540 = vmul.f32 %v267, %v332
    %v541 = vmul.f32 %v267, %v339
    %v542 = vmul.f32 %v267, %v346
    %v543 = vmul.f32 %v267, %v353
    %v544 = vmul.f32 %v267, %v360
    %v545 = vmul.f32 %v267, %v367
    %v546 = vmul.f32 %v267, %v374
    %v547 = vmul.f32 %v267, %v381
    %v548 = vmul.f32 %v267, %v388
    %v549 = vmul.f32 %v267, %v395
    %v550 = vmul.f32 %v267, %v402
    %v551 = vmul.f32 %v267, %v409
    %v552 = vmul.f32 %v267, %v416
    %v553 = vmul.f32 %v267, %v423
    %v554 = vmul.f32 %v267, %v430
    %v555 = vmul.f32 %v267, %v437
    %v556 = vmul.f32 %v267, %v444
    %v557 = vmul.f32 %v267, %v451
    %v558 = vmul.f32 %v267, %v458
    %v559 = vmul.f32 %v267, %v465
    %v560 = vmul.f32 %v267, %v472
    %v561 = vmul.f32 %v267, %v479
    %v562 = vmul.f32 %v267, %v486
    %v563 = vmul.f32 %v267, %v493
    %v564 = vmul.f32 %v267, %v500
    %v565 = vmul.f32 %v268, %v283
    %v566 = vmul.f32 %v268, %v290
    %v567 = vmul.f32 %v268, %v297
    %v568 = vmul.f32 %v268, %v304
    %v569 = vmul.f32 %v268, %v311
    %v570 = vmul.f32 %v268, %v318
    %v571 = vmul.f32 %v268, %v325
    %v572 = vmul.f32 %v268, %v332
    %v573 = vmul.f32 %v268, %v339
    %v574 = vmul.f32 %v268, %v346
    %v575 = vmul.f32 %v268, %v353
    %v576 = vmul.f32 %v268, %v360
    %v577 = vmul.f32 %v268, %v367
    %v578 = vmul.f32 %v268, %v374
    %v579 = vmul.f32 %v268, %v381
    %v580 = vmul.f32 %v268, %v388
    %v581 = vmul.f32 %v268, %v395
    %v582 = vmul.f32 %v268, %v402
    %v583 = vmul.f32 %v268, %v409
    %v584 = vmul.f32 %v268, %v416
    %v585 = vmul.f32 %v268, %v423
    %v586 = vmul.f32 %v268, %v430
    %v587 = vmul.f32 %v268, %v437
    %v588 = vmul.f32 %v268, %v444
    %v589 = vmul.f32 %v268, %v451
    %v590 = vmul.f32 %v268, %v458
    %v591 = vmul.f32 %v268, %v465
    %v592 = vmul.f32 %v268, %v472
    %v593 = vmul.f32 %v268, %v479
    %v594 = vmul.f32 %v268, %v486
    %v595 = vmul.f32 %v268, %v493
    %v596 = vmul.f32 %v268, %v500
    %661 = vset.pattern.permute.xlu0 0
    %662 = vperm.xlu0 %661, %v533
    %v663 = vpop.permute.xlu0 %662
    %664 = vset.pattern.permute.xlu0 0
    %665 = vperm.xlu0 %664, %v534
    %v666 = vpop.permute.xlu0 %665
    %667 = vset.pattern.permute.xlu0 0
    %668 = vperm.xlu0 %667, %v535
    %v669 = vpop.permute.xlu0 %668
    %670 = vset.pattern.permute.xlu0 0
    %671 = vperm.xlu0 %670, %v536
    %v672 = vpop.permute.xlu0 %671
    %673 = vset.pattern.permute.xlu0 0
    %674 = vperm.xlu0 %673, %v537
    %v675 = vpop.permute.xlu0 %674
    %676 = vset.pattern.permute.xlu0 0
    %677 = vperm.xlu0 %676, %v538
    %v678 = vpop.permute.xlu0 %677
    %679 = vset.pattern.permute.xlu0 0
    %680 = vperm.xlu0 %679, %v539
    %v681 = vpop.permute.xlu0 %680
    %682 = vset.pattern.permute.xlu0 0
    %683 = vperm.xlu0 %682, %v540
    %v684 = vpop.permute.xlu0 %683
    %685 = vset.pattern.permute.xlu0 0
    %686 = vperm.xlu0 %685, %v541
    %v687 = vpop.permute.xlu0 %686
    %688 = vset.pattern.permute.xlu0 0
    %689 = vperm.xlu0 %688, %v542
    %v690 = vpop.permute.xlu0 %689
    %691 = vset.pattern.permute.xlu0 0
    %692 = vperm.xlu0 %691, %v543
    %v693 = vpop.permute.xlu0 %692
    %694 = vset.pattern.permute.xlu0 0
    %695 = vperm.xlu0 %694, %v544
    %v696 = vpop.permute.xlu0 %695
    %697 = vset.pattern.permute.xlu0 0
    %698 = vperm.xlu0 %697, %v545
    %v699 = vpop.permute.xlu0 %698
    %700 = vset.pattern.permute.xlu0 0
    %701 = vperm.xlu0 %700, %v546
    %v702 = vpop.permute.xlu0 %701
    %703 = vset.pattern.permute.xlu0 0
    %704 = vperm.xlu0 %703, %v547
    %v705 = vpop.permute.xlu0 %704
    %706 = vset.pattern.permute.xlu0 0
    %707 = vperm.xlu0 %706, %v548
    %v708 = vpop.permute.xlu0 %707
    %709 = vset.pattern.permute.xlu0 0
    %710 = vperm.xlu0 %709, %v549
    %v711 = vpop.permute.xlu0 %710
    %712 = vset.pattern.permute.xlu0 0
    %713 = vperm.xlu0 %712, %v550
    %v714 = vpop.permute.xlu0 %713
    %715 = vset.pattern.permute.xlu0 0
    %716 = vperm.xlu0 %715, %v551
    %v717 = vpop.permute.xlu0 %716
    %718 = vset.pattern.permute.xlu0 0
    %719 = vperm.xlu0 %718, %v552
    %v720 = vpop.permute.xlu0 %719
    %721 = vset.pattern.permute.xlu0 0
    %722 = vperm.xlu0 %721, %v553
    %v723 = vpop.permute.xlu0 %722
    %724 = vset.pattern.permute.xlu0 0
    %725 = vperm.xlu0 %724, %v554
    %v726 = vpop.permute.xlu0 %725
    %727 = vset.pattern.permute.xlu0 0
    %728 = vperm.xlu0 %727, %v555
    %v729 = vpop.permute.xlu0 %728
    %730 = vset.pattern.permute.xlu0 0
    %731 = vperm.xlu0 %730, %v556
    %v732 = vpop.permute.xlu0 %731
    %733 = vset.pattern.permute.xlu0 0
    %734 = vperm.xlu0 %733, %v557
    %v735 = vpop.permute.xlu0 %734
    %736 = vset.pattern.permute.xlu0 0
    %737 = vperm.xlu0 %736, %v558
    %v738 = vpop.permute.xlu0 %737
    %739 = vset.pattern.permute.xlu0 0
    %740 = vperm.xlu0 %739, %v559
    %v741 = vpop.permute.xlu0 %740
    %742 = vset.pattern.permute.xlu0 0
    %743 = vperm.xlu0 %742, %v560
    %v744 = vpop.permute.xlu0 %743
    %745 = vset.pattern.permute.xlu0 0
    %746 = vperm.xlu0 %745, %v561
    %v747 = vpop.permute.xlu0 %746
    %748 = vset.pattern.permute.xlu0 0
    %749 = vperm.xlu0 %748, %v562
    %v750 = vpop.permute.xlu0 %749
    %751 = vset.pattern.permute.xlu0 0
    %752 = vperm.xlu0 %751, %v563
    %v753 = vpop.permute.xlu0 %752
    %754 = vset.pattern.permute.xlu0 0
    %755 = vperm.xlu0 %754, %v564
    %v756 = vpop.permute.xlu0 %755
    %757 = vset.pattern.permute.xlu0 0
    %758 = vperm.xlu0 %757, %v565
    %v759 = vpop.permute.xlu0 %758
    %760 = vset.pattern.permute.xlu0 0
    %761 = vperm.xlu0 %760, %v566
    %v762 = vpop.permute.xlu0 %761
    %763 = vset.pattern.permute.xlu0 0
    %764 = vperm.xlu0 %763, %v567
    %v765 = vpop.permute.xlu0 %764
    %766 = vset.pattern.permute.xlu0 0
    %767 = vperm.xlu0 %766, %v568
    %v768 = vpop.permute.xlu0 %767
    %769 = vset.pattern.permute.xlu0 0
    %770 = vperm.xlu0 %769, %v569
    %v771 = vpop.permute.xlu0 %770
    %772 = vset.pattern.permute.xlu0 0
    %773 = vperm.xlu0 %772, %v570
    %v774 = vpop.permute.xlu0 %773
    %775 = vset.pattern.permute.xlu0 0
    %776 = vperm.xlu0 %775, %v571
    %v777 = vpop.permute.xlu0 %776
    %778 = vset.pattern.permute.xlu0 0
    %779 = vperm.xlu0 %778, %v572
    %v780 = vpop.permute.xlu0 %779
    %781 = vset.pattern.permute.xlu0 0
    %782 = vperm.xlu0 %781, %v573
    %v783 = vpop.permute.xlu0 %782
    %784 = vset.pattern.permute.xlu0 0
    %785 = vperm.xlu0 %784, %v574
    %v786 = vpop.permute.xlu0 %785
    %787 = vset.pattern.permute.xlu0 0
    %788 = vperm.xlu0 %787, %v575
    %v789 = vpop.permute.xlu0 %788
    %790 = vset.pattern.permute.xlu0 0
    %791 = vperm.xlu0 %790, %v576
    %v792 = vpop.permute.xlu0 %791
    %793 = vset.pattern.permute.xlu0 0
    %794 = vperm.xlu0 %793, %v577
    %v795 = vpop.permute.xlu0 %794
    %796 = vset.pattern.permute.xlu0 0
    %797 = vperm.xlu0 %796, %v578
    %v798 = vpop.permute.xlu0 %797
    %799 = vset.pattern.permute.xlu0 0
    %800 = vperm.xlu0 %799, %v579
    %v801 = vpop.permute.xlu0 %800
    %802 = vset.pattern.permute.xlu0 0
    %803 = vperm.xlu0 %802, %v580
    %v804 = vpop.permute.xlu0 %803
    %805 = vset.pattern.permute.xlu0 0
    %806 = vperm.xlu0 %805, %v581
    %v807 = vpop.permute.xlu0 %806
    %808 = vset.pattern.permute.xlu0 0
    %809 = vperm.xlu0 %808, %v582
    %v810 = vpop.permute.xlu0 %809
    %811 = vset.pattern.permute.xlu0 0
    %812 = vperm.xlu0 %811, %v583
    %v813 = vpop.permute.xlu0 %812
    %814 = vset.pattern.permute.xlu0 0
    %815 = vperm.xlu0 %814, %v584
    %v816 = vpop.permute.xlu0 %815
    %817 = vset.pattern.permute.xlu0 0
    %818 = vperm.xlu0 %817, %v585
    %v819 = vpop.permute.xlu0 %818
    %820 = vset.pattern.permute.xlu0 0
    %821 = vperm.xlu0 %820, %v586
    %v822 = vpop.permute.xlu0 %821
    %823 = vset.pattern.permute.xlu0 0
    %824 = vperm.xlu0 %823, %v587
    %v825 = vpop.permute.xlu0 %824
    %826 = vset.pattern.permute.xlu0 0
    %827 = vperm.xlu0 %826, %v588
    %v828 = vpop.permute.xlu0 %827
    %829 = vset.pattern.permute.xlu0 0
    %830 = vperm.xlu0 %829, %v589
    %v831 = vpop.permute.xlu0 %830
    %832 = vset.pattern.permute.xlu0 0
    %833 = vperm.xlu0 %832, %v590
    %v834 = vpop.permute.xlu0 %833
    %835 = vset.pattern.permute.xlu0 0
    %836 = vperm.xlu0 %835, %v591
    %v837 = vpop.permute.xlu0 %836
    %838 = vset.pattern.permute.xlu0 0
    %839 = vperm.xlu0 %838, %v592
    %v840 = vpop.permute.xlu0 %839
    %841 = vset.pattern.permute.xlu0 0
    %842 = vperm.xlu0 %841, %v593
    %v843 = vpop.permute.xlu0 %842
    %844 = vset.pattern.permute.xlu0 0
    %845 = vperm.xlu0 %844, %v594
    %v846 = vpop.permute.xlu0 %845
    %847 = vset.pattern.permute.xlu0 0
    %848 = vperm.xlu0 %847, %v595
    %v849 = vpop.permute.xlu0 %848
    %850 = vset.pattern.permute.xlu0 0
    %851 = vperm.xlu0 %850, %v596
    %v852 = vpop.permute.xlu0 %851
    %v853 = vperm.slane %v663, %v220
    %v854 = vperm.slane %v666, %v220
    %v855 = vperm.slane %v669, %v220
    %v856 = vperm.slane %v672, %v220
    %v857 = vperm.slane %v675, %v220
    %v858 = vperm.slane %v678, %v220
    %v859 = vperm.slane %v681, %v220
    %v860 = vperm.slane %v684, %v220
    %v861 = vperm.slane %v687, %v220
    %v862 = vperm.slane %v690, %v220
    %v863 = vperm.slane %v693, %v220
    %v864 = vperm.slane %v696, %v220
    %v865 = vperm.slane %v699, %v220
    %v866 = vperm.slane %v702, %v220
    %v867 = vperm.slane %v705, %v220
    %v868 = vperm.slane %v708, %v220
    %v869 = vperm.slane %v711, %v220
    %v870 = vperm.slane %v714, %v220
    %v871 = vperm.slane %v717, %v220
    %v872 = vperm.slane %v720, %v220
    %v873 = vperm.slane %v723, %v220
    %v874 = vperm.slane %v726, %v220
    %v875 = vperm.slane %v729, %v220
    %v876 = vperm.slane %v732, %v220
    %v877 = vperm.slane %v735, %v220
    %v878 = vperm.slane %v738, %v220
    %v879 = vperm.slane %v741, %v220
    %v880 = vperm.slane %v744, %v220
    %v881 = vperm.slane %v747, %v220
    %v882 = vperm.slane %v750, %v220
    %v883 = vperm.slane %v753, %v220
    %v884 = vperm.slane %v756, %v220
    %v885 = vperm.slane %v759, %v220
    %v886 = vperm.slane %v762, %v220
    %v887 = vperm.slane %v765, %v220
    %v888 = vperm.slane %v768, %v220
    %v889 = vperm.slane %v771, %v220
    %v890 = vperm.slane %v774, %v220
    %v891 = vperm.slane %v777, %v220
    %v892 = vperm.slane %v780, %v220
    %v893 = vperm.slane %v783, %v220
    %v894 = vperm.slane %v786, %v220
    %v895 = vperm.slane %v789, %v220
    %v896 = vperm.slane %v792, %v220
    %v897 = vperm.slane %v795, %v220
    %v898 = vperm.slane %v798, %v220
    %v899 = vperm.slane %v801, %v220
    %v900 = vperm.slane %v804, %v220
    %v901 = vperm.slane %v807, %v220
    %v902 = vperm.slane %v810, %v220
    %v903 = vperm.slane %v813, %v220
    %v904 = vperm.slane %v816, %v220
    %v905 = vperm.slane %v819, %v220
    %v906 = vperm.slane %v822, %v220
    %v907 = vperm.slane %v825, %v220
    %v908 = vperm.slane %v828, %v220
    %v909 = vperm.slane %v831, %v220
    %v910 = vperm.slane %v834, %v220
    %v911 = vperm.slane %v837, %v220
    %v912 = vperm.slane %v840, %v220
    %v913 = vperm.slane %v843, %v220
    %v914 = vperm.slane %v846, %v220
    %v915 = vperm.slane %v849, %v220
    %v916 = vperm.slane %v852, %v220
    %v917 = vsel %vm255, %v854, %v853
    %vm918 = vcmask 1042434
    %v919 = vsel %vm918, %v855, %v917
    %vm920 = vcmask 1043459
    %v921 = vsel %vm920, %v856, %v919
    %vm922 = vcmask 1044484
    %v923 = vsel %vm922, %v857, %v921
    %vm924 = vcmask 1045509
    %v925 = vsel %vm924, %v858, %v923
    %vm926 = vcmask 1046534
    %v927 = vsel %vm926, %v859, %v925
    %vm928 = vcmask 1047559
    %v929 = vsel %vm928, %v860, %v927
    %v930 = vsel %vm255, %v862, %v861
    %v931 = vsel %vm918, %v863, %v930
    %v932 = vsel %vm920, %v864, %v931
    %v933 = vsel %vm922, %v865, %v932
    %v934 = vsel %vm924, %v866, %v933
    %v935 = vsel %vm926, %v867, %v934
    %v936 = vsel %vm928, %v868, %v935
    %v937 = vsel %vm255, %v870, %v869
    %v938 = vsel %vm918, %v871, %v937
    %v939 = vsel %vm920, %v872, %v938
    %v940 = vsel %vm922, %v873, %v939
    %v941 = vsel %vm924, %v874, %v940
    %v942 = vsel %vm926, %v875, %v941
    %v943 = vsel %vm928, %v876, %v942
    %v944 = vsel %vm255, %v878, %v877
    %v945 = vsel %vm918, %v879, %v944
    %v946 = vsel %vm920, %v880, %v945
    %v947 = vsel %vm922, %v881, %v946
    %v948 = vsel %vm924, %v882, %v947
    %v949 = vsel %vm926, %v883, %v948
    %v950 = vsel %vm928, %v884, %v949
    %v951 = vsel %vm255, %v886, %v885
    %v952 = vsel %vm918, %v887, %v951
    %v953 = vsel %vm920, %v888, %v952
    %v954 = vsel %vm922, %v889, %v953
    %v955 = vsel %vm924, %v890, %v954
    %v956 = vsel %vm926, %v891, %v955
    %v957 = vsel %vm928, %v892, %v956
    %v958 = vsel %vm255, %v894, %v893
    %v959 = vsel %vm918, %v895, %v958
    %v960 = vsel %vm920, %v896, %v959
    %v961 = vsel %vm922, %v897, %v960
    %v962 = vsel %vm924, %v898, %v961
    %v963 = vsel %vm926, %v899, %v962
    %v964 = vsel %vm928, %v900, %v963
    %v965 = vsel %vm255, %v902, %v901
    %v966 = vsel %vm918, %v903, %v965
    %v967 = vsel %vm920, %v904, %v966
    %v968 = vsel %vm922, %v905, %v967
    %v969 = vsel %vm924, %v906, %v968
    %v970 = vsel %vm926, %v907, %v969
    %v971 = vsel %vm928, %v908, %v970
    %v972 = vsel %vm255, %v910, %v909
    %v973 = vsel %vm918, %v911, %v972
    %v974 = vsel %vm920, %v912, %v973
    %v975 = vsel %vm922, %v913, %v974
    %v976 = vsel %vm924, %v914, %v975
    %v977 = vsel %vm926, %v915, %v976
    %v978 = vsel %vm928, %v916, %v977
    %vm987 = vcmask 15360
    %v988 = vsel %vm987, %v929, 0.0
    %989 = vadd.xlane.f32.xlu0 %v988
    %v990 = vpop.xlane.xlu0 %989
    %v991 = vsel %vm987, %v936, 0.0
    %992 = vadd.xlane.f32.xlu0 %v991
    %v993 = vpop.xlane.xlu0 %992
    %v994 = vsel %vm987, %v943, 0.0
    %995 = vadd.xlane.f32.xlu0 %v994
    %v996 = vpop.xlane.xlu0 %995
    %v997 = vsel %vm987, %v950, 0.0
    %998 = vadd.xlane.f32.xlu0 %v997
    %v999 = vpop.xlane.xlu0 %998
    %v1000 = vsel %vm987, %v957, 0.0
    %1001 = vadd.xlane.f32.xlu0 %v1000
    %v1002 = vpop.xlane.xlu0 %1001
    %v1003 = vsel %vm987, %v964, 0.0
    %1004 = vadd.xlane.f32.xlu0 %v1003
    %v1005 = vpop.xlane.xlu0 %1004
    %v1006 = vsel %vm987, %v971, 0.0
    %1007 = vadd.xlane.f32.xlu0 %v1006
    %v1008 = vpop.xlane.xlu0 %1007
    %v1009 = vsel %vm987, %v978, 0.0
    %1010 = vadd.xlane.f32.xlu0 %v1009
    %v1011 = vpop.xlane.xlu0 %1010
    %v1012 = vadd.f32 %v990, 3.0
    %v1013 = vadd.f32 %v993, 3.0
    %v1014 = vadd.f32 %v996, 3.0
    %v1015 = vadd.f32 %v999, 3.0
    %v1016 = vadd.f32 %v1002, 3.0
    %v1017 = vadd.f32 %v1005, 3.0
    %v1018 = vadd.f32 %v1008, 3.0
    %v1019 = vadd.f32 %v1011, 3.0
    %v1020 = vmax.f32 %v1012, 0.0
    %v1021 = vmax.f32 %v1013, 0.0
    %v1022 = vmax.f32 %v1014, 0.0
    %v1023 = vmax.f32 %v1015, 0.0
    %v1024 = vmax.f32 %v1016, 0.0
    %v1025 = vmax.f32 %v1017, 0.0
    %v1026 = vmax.f32 %v1018, 0.0
    %v1027 = vmax.f32 %v1019, 0.0
    %v1028 = vmin.f32 %v1020, 6.0
    %v1029 = vmin.f32 %v1021, 6.0
    %v1030 = vmin.f32 %v1022, 6.0
    %v1031 = vmin.f32 %v1023, 6.0
    %v1032 = vmin.f32 %v1024, 6.0
    %v1033 = vmin.f32 %v1025, 6.0
    %v1034 = vmin.f32 %v1026, 6.0
    %v1035 = vmin.f32 %v1027, 6.0
    %v1036 = vmul.f32 %v990, %v1028
    %v1037 = vmul.f32 %v993, %v1029
    %v1038 = vmul.f32 %v996, %v1030
    %v1039 = vmul.f32 %v999, %v1031
    %v1040 = vmul.f32 %v1002, %v1032
    %v1041 = vmul.f32 %v1005, %v1033
    %v1042 = vmul.f32 %v1008, %v1034
    %v1043 = vmul.f32 %v1011, %v1035
    %v1044 = vmul.f32 %v1036, 0.16666667
    %v1045 = vmul.f32 %v1037, 0.16666667
    %v1046 = vmul.f32 %v1038, 0.16666667
    %v1047 = vmul.f32 %v1039, 0.16666667
    %v1048 = vmul.f32 %v1040, 0.16666667
    %v1049 = vmul.f32 %v1041, 0.16666667
    %v1050 = vmul.f32 %v1042, 0.16666667
    %v1051 = vmul.f32 %v1043, 0.16666667
    %v1052 = vmul.f32 %v990, %v1044
    %v1053 = vmul.f32 %v993, %v1045
    %v1054 = vmul.f32 %v996, %v1046
    %v1055 = vmul.f32 %v999, %v1047
    %v1056 = vmul.f32 %v1002, %v1048
    %v1057 = vmul.f32 %v1005, %v1049
    %v1058 = vmul.f32 %v1008, %v1050
    %v1059 = vmul.f32 %v1011, %v1051
    %v1060 = vmul.f32 %v31, %v1052
    %v1061 = vmul.f32 %v32, %v1052
    %v1062 = vmul.f32 %v33, %v1053
    %v1063 = vmul.f32 %v34, %v1053
    %v1064 = vmul.f32 %v35, %v1054
    %v1065 = vmul.f32 %v36, %v1054
    %v1066 = vmul.f32 %v37, %v1055
    %v1067 = vmul.f32 %v38, %v1055
    %v1068 = vmul.f32 %v39, %v1056
    %v1069 = vmul.f32 %v40, %v1056
    %v1070 = vmul.f32 %v41, %v1057
    %v1071 = vmul.f32 %v42, %v1057
    %v1072 = vmul.f32 %v43, %v1058
    %v1073 = vmul.f32 %v44, %v1058
    %v1074 = vmul.f32 %v45, %v1059
    %v1075 = vmul.f32 %v46, %v1059
    %1076 = vst [vmem:[#allocation5] sm:$0xff] %v1060
    %1077 = vst [vmem:[#allocation5 + $0x8] sm:$0xff] %v1061
    %1078 = vst [vmem:[#allocation5 + $0x10] sm:$0xff] %v1062
    %1079 = vst [vmem:[#allocation5 + $0x18] sm:$0xff] %v1063
    %1080 = vst [vmem:[#allocation5 + $0x20] sm:$0xff] %v1064
    %1081 = vst [vmem:[#allocation5 + $0x28] sm:$0xff] %v1065
    %1082 = vst [vmem:[#allocation5 + $0x30] sm:$0xff] %v1066
    %1083 = vst [vmem:[#allocation5 + $0x38] sm:$0xff] %v1067
    %1084 = vst [vmem:[#allocation5 + $0x40] sm:$0xff] %v1068
    %1085 = vst [vmem:[#allocation5 + $0x48] sm:$0xff] %v1069
    %1086 = vst [vmem:[#allocation5 + $0x50] sm:$0xff] %v1070
    %1087 = vst [vmem:[#allocation5 + $0x58] sm:$0xff] %v1071
    %1088 = vst [vmem:[#allocation5 + $0x60] sm:$0xff] %v1072
    %1089 = vst [vmem:[#allocation5 + $0x68] sm:$0xff] %v1073
    %1090 = vst [vmem:[#allocation5 + $0x70] sm:$0xff] %v1074
    %1091 = vst [vmem:[#allocation5 + $0x78] sm:$0xff] %v1075
    // Predicated region
    $region18: #{tpu_custom_call.1} parent=1 // pred_check
      _
    $region19: #{tpu_custom_call.1} parent=1 // pred_check_branch
      %1093 = sbr.rel (0) target = $region21
    $region20: #{tpu_custom_call.1} parent=1 // pred_region
      %1095 = vsyncadd [#allocation4], 0
      %s1096 = sshll.u32 [#allocation5], 4
      %s1097 = int_to_ptr.vmem [resolvable:$true] %s1096
      %s1098 = sshll.u32 %s3, 4
      %s1099 = int_to_ptr.hbm [resolvable:$true] %s1098
      %1104 = dma.vmem_to_hbm [thread:$0]  %s1097, 2048, %s1099, [#allocation4], 256, 256, 16
    $region21: #{tpu_custom_call.1} parent=1 // pred_fallthru
      _
    // Predicated region
    $region22: #{tpu_custom_call.1} parent=1 // pred_check
      _
    $region23: #{tpu_custom_call.1} parent=1 // pred_check_branch
      %1106 = sbr.rel (0) target = $region25
    $region24: #{tpu_custom_call.1} parent=1 // pred_region
      %1108 = dma.done [#allocation4], 2048
    $region25: #{tpu_custom_call.1} parent=1 // pred_fallthru
      _
    %1109 = vsyncpa [#allocation3], 1
    %1110 = vsyncpa [#allocation4], 1

</llo_original>
